<compile_context>
chip_gen: v5e
topology: v5e:2x2
jax: 0.10.0
libtpu: 0.0.40
codegen_flags: <defaults>
</compile_context>

<pallas_src>
import jax
import jax.numpy as jnp
from jax import lax
from jax.experimental import pallas as pl
from jax.experimental.pallas import tpu as pltpu  # noqa: F401  (kept for TPU-specific knobs)

# ----------------------------- configuration -------------------------------
C_IN = 4                      # in_channels (must be even)
C_RED = C_IN // 2             # reduced channels
B = 2
H_IMG, W_IMG = 16, 16
N_SEQ = H_IMG * W_IMG         # 256 (flattened spatial, lane dim)
CAT_CH = 4 * C_RED            # channels after torch.cat

NROWS = 1 + 3 * 8             # 25 effective taps (center combined + 24 shifted)
NROWS_B = NROWS * B           # 50 batch-interleaved rows
VCOLS = B * C_IN              # 8  (block-diagonal weight columns)
CCOL = VCOLS                  # per-row bias column in the slab
GCOL = VCOLS + 1              # global bias column in the slab
SLAB_ROWS = 56                # 50 padded up to a multiple of 8
SLAB_COLS = 16


# ------------------------------- kernel ------------------------------------
def lsa_kernel(x_ref, loc_ref, p_ref, o_ref):
    x = x_ref[...]            # (B*C_IN, N) = (8, 256) f32
    loc = loc_ref[...]        # (8, 256)
    p = p_ref[...]            # (56, 16) packed parameter slab

    vbig = p[0:NROWS_B, 0:VCOLS]            # (50, 8) block-diag folded weights
    cbig = p[0:NROWS_B, CCOL:CCOL + 1]      # (50, 1) per-row bias
    g = p[0:1, GCOL:GCOL + 1]               # (1, 1) global bias

    # ONE matmul: every (dilation, tap, batch) projection of the input at once.
    U = jnp.dot(vbig, x, preferred_element_type=jnp.float32) + cbig   # (50, 256)

    # x-coordinate of each flattened pixel (single iota, masks hoisted below).
    x_idx = lax.broadcasted_iota(jnp.int32, (1, N_SEQ), 1) % W_IMG

    def shift(a, s):
        """shifted[r, j] = a[r, j + s] with zero fill at the flat ends."""
        rows = a.shape[0]
        if s > 0:
            return jnp.concatenate(
                [a[:, s:], jnp.zeros((rows, s), a.dtype)], axis=1)
        if s < 0:
            return jnp.concatenate(
                [jnp.zeros((rows, -s), a.dtype), a[:, :N_SEQ + s]], axis=1)
        return a

    # Center tap (no shift) + global bias.
    acc = U[0:B, :] + g                     # (2, 256): one att row per batch
    row = B
    for d in (1, 2, 3):
        # dx = 0 taps (dy = -d, +d): flat shift only, zero fill handles rows.
        for dy in (-d, d):
            acc = acc + shift(U[row:row + B, :], dy * W_IMG)
            row += B
        # dx = -d group (dy = -d, 0, +d): pre-zero columns that would wrap.
        blk = jnp.where(x_idx < W_IMG - d, U[row:row + 3 * B, :], 0.0)
        for j, dy in enumerate((-d, 0, d)):
            acc = acc + shift(blk[j * B:(j + 1) * B, :], dy * W_IMG - d)
        row += 3 * B
        # dx = +d group.
        blk = jnp.where(x_idx >= d, U[row:row + 3 * B, :], 0.0)
        for j, dy in enumerate((-d, 0, d)):
            acc = acc + shift(blk[j * B:(j + 1) * B, :], dy * W_IMG + d)
        row += 3 * B

    # out = loc * att + loc  ==  loc * (att + 1)
    scale = acc + 1.0                        # (2, 256)
    for b in range(B):
        o_ref[b * C_IN:(b + 1) * C_IN, :] = (
            loc[b * C_IN:(b + 1) * C_IN, :] * scale[b:b + 1, :]
        ).astype(o_ref.dtype)


# ------------------------------- wrapper ------------------------------------
def local_spatial_attention(feature_maps, local_channel_output, params_slab):
    """feature_maps, local_channel_output: (B, C, H, W) f32 -> (B, C, H, W)."""
    b, c, h, w = feature_maps.shape
    n = h * w
    x = jnp.reshape(feature_maps, (b * c, n))              # contiguous reshape
    loc = jnp.reshape(local_channel_output, (b * c, n))

    out = pl.pallas_call(
        lsa_kernel,
        out_shape=jax.ShapeDtypeStruct((b * c, n), jnp.float32),
        grid=(1,),
        in_specs=[
            pl.BlockSpec((b * c, n), lambda i: (0, 0)),              # inputs
            pl.BlockSpec((b * c, n), lambda i: (0, 0)),              # local out
            pl.BlockSpec((SLAB_ROWS, SLAB_COLS), lambda i: (0, 0)),  # params
        ],
        out_specs=pl.BlockSpec((b * c, n), lambda i: (0, 0)),
    )(x, loc, params_slab)

    return jnp.reshape(out, (b, c, h, w))


# -------------------------- parameter handling ------------------------------
def init_raw_params(key):
    ks = jax.random.split(key, 6)
    std = 0.1
    w1 = jax.random.normal(ks[0], (C_RED, C_IN), jnp.float32) * std   # conv1x1_1
    b1 = jax.random.normal(ks[1], (C_RED,), jnp.float32) * std
    wd = jax.random.normal(ks[2], (3, C_RED, C_RED, 3, 3), jnp.float32) * std
    bd = jax.random.normal(ks[3], (3, C_RED), jnp.float32) * std
    w2 = jax.random.normal(ks[4], (1, CAT_CH), jnp.float32) * std     # conv1x1_2
    b2 = jax.random.normal(ks[5], (1,), jnp.float32) * std
    return w1, b1, wd, bd, w2, b2


def pack_params(w1, b1, wd, bd, w2, b2):
    """Fold the whole linear path into one (56, 16) f32 slab (single DMA).

    Row ordering (tap-major, batch interleaved) must match the kernel loop:
      tap 0: center (1x1 identity branch + the three dilated-conv center taps)
      then per dilation d: [dy=-d,dx=0], [dy=+d,dx=0],
                           [dx=-d: dy=-d,0,+d], [dx=+d: dy=-d,0,+d]
    """
    w2_a = w2[:, 0:C_RED]                                       # 1x1 branch
    w2_k = [w2[:, C_RED * (k + 1):C_RED * (k + 2)] for k in range(3)]

    v_rows = [w2_a + sum(w2_k[k] @ wd[k][:, :, 1, 1] for k in range(3))]
    for k in range(3):
        for ky in (0, 2):                 # dx = 0, dy = -d, +d
            v_rows.append(w2_k[k] @ wd[k][:, :, ky, 1])
        for ky in (0, 1, 2):              # dx = -d, dy = -d, 0, +d
            v_rows.append(w2_k[k] @ wd[k][:, :, ky, 0])
        for ky in (0, 1, 2):              # dx = +d, dy = -d, 0, +d
            v_rows.append(w2_k[k] @ wd[k][:, :, ky, 2])
    V = jnp.concatenate(v_rows, axis=0)                          # (25, C_RED)

    V_eff = V @ w1                                               # (25, C_IN)
    c_eff = V @ b1                                               # (25,)
    g = b2[0] + sum((w2_k[k] @ bd[k])[0] for k in range(3))      # global bias

    slab = jnp.zeros((SLAB_ROWS, SLAB_COLS), jnp.float32)
    for b in range(B):   # batch-interleaved block-diagonal weight + bias
        slab = slab.at[b:NROWS_B:B, b * C_IN:(b + 1) * C_IN].set(V_eff)
        slab = slab.at[b:NROWS_B:B, CCOL].set(c_eff)
    slab = slab.at[0, GCOL].set(g)
    return slab


# ----------------------------- pure-JAX reference ---------------------------
def reference(feature_maps, local_out, w1, b1, wd, bd, w2, b2):
    def conv(x, w, b, dilation, padding):
        y = lax.conv_general_dilated(
            x, w, window_strides=(1, 1),
            padding=((padding, padding), (padding, padding)),
            rhs_dilation=(dilation, dilation),
            dimension_numbers=("NCHW", "OIHW", "NCHW"))
        return y + b.reshape(1, -1, 1, 1)

    att = conv(feature_maps, w1.reshape(C_RED, C_IN, 1, 1), b1, 1, 0)
    d1 = conv(att, wd[0], bd[0], 1, 1)
    d2 = conv(att, wd[1], bd[1], 2, 2)
    d3 = conv(att, wd[2], bd[2], 3, 3)
    cat = jnp.concatenate([att, d1, d2, d3], axis=1)
    att2 = conv(cat, w2.reshape(1, CAT_CH, 1, 1), b2, 1, 0)
    return local_out * att2 + local_out


# ---------------------------------- main -------------------------------------
if __name__ == "__main__":
    key = jax.random.PRNGKey(0)
    kf, kl, kp = jax.random.split(key, 3)
    fmap = jax.random.normal(kf, (B, C_IN, H_IMG, W_IMG), jnp.float32)
    loc = jax.random.normal(kl, (B, C_IN, H_IMG, W_IMG), jnp.float32)

    raw = init_raw_params(kp)
    slab = pack_params(*raw)

    out = local_spatial_attention(fmap, loc, slab)
    jax.block_until_ready(out)
    assert out.shape == (B, C_IN, H_IMG, W_IMG)

    ref = reference(fmap, loc, *raw)
    err = float(jnp.max(jnp.abs(out - ref)))
    assert err < 1e-4, f"mismatch vs reference: {err}"

    print("KERNEL_OK")
</pallas_src>

<mosaic_0001>
module attributes {stable_mosaic.version = 11 : i64} {
  func.func @lsa_kernel(%arg0: i32, %arg1: memref<8x256xf32, #tpu.memory_space<vmem>>, %arg2: memref<8x256xf32, #tpu.memory_space<vmem>>, %arg3: memref<56x16xf32, #tpu.memory_space<vmem>>, %arg4: memref<8x256xf32, #tpu.memory_space<vmem>>) attributes {dimension_semantics = [#tpu.dimension_semantics<arbitrary>], iteration_bounds = array<i64: 1>, scalar_prefetch = 0 : i64, scratch_operands = 0 : i64, tpu.core_type = #tpu.core_type<tc>, window_params = [{pipeline_mode = #tpu.pipeline_mode<synchronous>, transform_indices = @transform_0, window_bounds = array<i64: 8, 256>}, {pipeline_mode = #tpu.pipeline_mode<synchronous>, transform_indices = @transform_1, window_bounds = array<i64: 8, 256>}, {pipeline_mode = #tpu.pipeline_mode<synchronous>, transform_indices = @transform_2, window_bounds = array<i64: 56, 16>}, {pipeline_mode = #tpu.pipeline_mode<synchronous>, transform_indices = @transform_3, window_bounds = array<i64: 8, 256>}]} {
    %c0 = arith.constant 0 : index
    %c0_0 = arith.constant 0 : index
    %0 = vector.load %arg1[%c0, %c0_0] : memref<8x256xf32, #tpu.memory_space<vmem>>, vector<8x256xf32>
    %c0_1 = arith.constant 0 : index
    %c0_2 = arith.constant 0 : index
    %1 = vector.load %arg2[%c0_1, %c0_2] : memref<8x256xf32, #tpu.memory_space<vmem>>, vector<8x256xf32>
    %c0_3 = arith.constant 0 : index
    %c0_4 = arith.constant 0 : index
    %2 = vector.load %arg3[%c0_3, %c0_4] : memref<56x16xf32, #tpu.memory_space<vmem>>, vector<56x16xf32>
    %3 = vector.extract_strided_slice %2 {offsets = [0, 0], sizes = [50, 8], strides = [1, 1]} : vector<56x16xf32> to vector<50x8xf32>
    %4 = vector.extract_strided_slice %2 {offsets = [0, 8], sizes = [50, 1], strides = [1, 1]} : vector<56x16xf32> to vector<50x1xf32>
    %5 = vector.extract_strided_slice %2 {offsets = [0, 9], sizes = [1, 1], strides = [1, 1]} : vector<56x16xf32> to vector<1x1xf32>
    %cst = arith.constant dense<0.000000e+00> : vector<50x256xf32>
    %6 = tpu.matmul %3, %0, %cst {dimension_numbers = #tpu.dot_dimension_numbers<[1], [0], [0], [1], [0, 0, 1, 1], [], []>} : vector<50x8xf32>, vector<8x256xf32>, vector<50x256xf32> -> vector<50x256xf32>
    %7 = vector.broadcast %4 : vector<50x1xf32> to vector<50x256xf32>
    %8 = arith.addf %6, %7 : vector<50x256xf32>
    %9 = tpu.iota {dimensions = array<i32: 1>} : vector<1x256xi32>
    %c16_i32 = arith.constant 16 : i32
    %c0_i32 = arith.constant 0 : i32
    %10 = arith.cmpi eq, %c16_i32, %c0_i32 : i32
    %c1_i32 = arith.constant 1 : i32
    %11 = arith.select %10, %c1_i32, %c16_i32 : i32
    %12 = vector.broadcast %11 : i32 to vector<1x256xi32>
    %13 = arith.remsi %9, %12 : vector<1x256xi32>
    %c0_i32_5 = arith.constant 0 : i32
    %14 = vector.broadcast %c0_i32_5 : i32 to vector<1x256xi32>
    %15 = arith.cmpi ne, %13, %14 : vector<1x256xi32>
    %c0_i32_6 = arith.constant 0 : i32
    %16 = vector.broadcast %c0_i32_6 : i32 to vector<1x256xi32>
    %17 = arith.cmpi slt, %13, %16 : vector<1x256xi32>
    %c0_i32_7 = arith.constant 0 : i32
    %18 = arith.cmpi slt, %11, %c0_i32_7 : i32
    %19 = vector.broadcast %18 : i1 to vector<1x256xi1>
    %20 = vector.broadcast %19 : vector<1x256xi1> to vector<1x256xi1>
    %21 = arith.xori %17, %20 : vector<1x256xi1>
    %22 = arith.andi %21, %15 : vector<1x256xi1>
    %23 = vector.broadcast %11 : i32 to vector<1x256xi32>
    %24 = arith.addi %13, %23 : vector<1x256xi32>
    %25 = arith.select %22, %24, %13 : vector<1x256xi1>, vector<1x256xi32>
    %26 = vector.extract_strided_slice %8 {offsets = [0, 0], sizes = [2, 256], strides = [1, 1]} : vector<50x256xf32> to vector<2x256xf32>
    %27 = vector.broadcast %5 : vector<1x1xf32> to vector<2x256xf32>
    %28 = arith.addf %26, %27 : vector<2x256xf32>
    %29 = vector.extract_strided_slice %8 {offsets = [2, 0], sizes = [2, 256], strides = [1, 1]} : vector<50x256xf32> to vector<2x256xf32>
    %cst_8 = arith.constant 0.000000e+00 : f32
    %30 = vector.broadcast %cst_8 : f32 to vector<2x16xf32>
    %31 = vector.extract_strided_slice %29 {offsets = [0, 0], sizes = [2, 240], strides = [1, 1]} : vector<2x256xf32> to vector<2x240xf32>
    %32 = tpu.concatenate %30, %31 in 1 : vector<2x16xf32>, vector<2x240xf32> -> vector<2x256xf32>
    %33 = arith.addf %28, %32 : vector<2x256xf32>
    %34 = vector.extract_strided_slice %8 {offsets = [4, 0], sizes = [2, 256], strides = [1, 1]} : vector<50x256xf32> to vector<2x256xf32>
    %35 = vector.extract_strided_slice %34 {offsets = [0, 16], sizes = [2, 240], strides = [1, 1]} : vector<2x256xf32> to vector<2x240xf32>
    %cst_9 = arith.constant 0.000000e+00 : f32
    %36 = vector.broadcast %cst_9 : f32 to vector<2x16xf32>
    %37 = tpu.concatenate %35, %36 in 1 : vector<2x240xf32>, vector<2x16xf32> -> vector<2x256xf32>
    %38 = arith.addf %33, %37 : vector<2x256xf32>
    %c15_i32 = arith.constant 15 : i32
    %39 = vector.broadcast %c15_i32 : i32 to vector<1x256xi32>
    %40 = arith.cmpi slt, %25, %39 : vector<1x256xi32>
    %41 = vector.extract_strided_slice %8 {offsets = [6, 0], sizes = [6, 256], strides = [1, 1]} : vector<50x256xf32> to vector<6x256xf32>
    %cst_10 = arith.constant 0.000000e+00 : f32
    %42 = vector.shape_cast %40 : vector<1x256xi1> to vector<1x256xi1>
    %43 = vector.broadcast %42 : vector<1x256xi1> to vector<6x256xi1>
    %44 = vector.broadcast %cst_10 : f32 to vector<6x256xf32>
    %45 = arith.select %43, %41, %44 : vector<6x256xi1>, vector<6x256xf32>
    %46 = vector.extract_strided_slice %45 {offsets = [0, 0], sizes = [2, 256], strides = [1, 1]} : vector<6x256xf32> to vector<2x256xf32>
    %cst_11 = arith.constant 0.000000e+00 : f32
    %47 = vector.broadcast %cst_11 : f32 to vector<2x17xf32>
    %48 = vector.extract_strided_slice %46 {offsets = [0, 0], sizes = [2, 239], strides = [1, 1]} : vector<2x256xf32> to vector<2x239xf32>
    %49 = tpu.concatenate %47, %48 in 1 : vector<2x17xf32>, vector<2x239xf32> -> vector<2x256xf32>
    %50 = arith.addf %38, %49 : vector<2x256xf32>
    %51 = vector.extract_strided_slice %45 {offsets = [2, 0], sizes = [2, 256], strides = [1, 1]} : vector<6x256xf32> to vector<2x256xf32>
    %cst_12 = arith.constant 0.000000e+00 : f32
    %52 = vector.broadcast %cst_12 : f32 to vector<2x1xf32>
    %53 = vector.extract_strided_slice %51 {offsets = [0, 0], sizes = [2, 255], strides = [1, 1]} : vector<2x256xf32> to vector<2x255xf32>
    %54 = tpu.concatenate %52, %53 in 1 : vector<2x1xf32>, vector<2x255xf32> -> vector<2x256xf32>
    %55 = arith.addf %50, %54 : vector<2x256xf32>
    %56 = vector.extract_strided_slice %45 {offsets = [4, 0], sizes = [2, 256], strides = [1, 1]} : vector<6x256xf32> to vector<2x256xf32>
    %57 = vector.extract_strided_slice %56 {offsets = [0, 15], sizes = [2, 241], strides = [1, 1]} : vector<2x256xf32> to vector<2x241xf32>
    %cst_13 = arith.constant 0.000000e+00 : f32
    %58 = vector.broadcast %cst_13 : f32 to vector<2x15xf32>
    %59 = tpu.concatenate %57, %58 in 1 : vector<2x241xf32>, vector<2x15xf32> -> vector<2x256xf32>
    %60 = arith.addf %55, %59 : vector<2x256xf32>
    %c1_i32_14 = arith.constant 1 : i32
    %61 = vector.broadcast %c1_i32_14 : i32 to vector<1x256xi32>
    %62 = arith.cmpi sge, %25, %61 : vector<1x256xi32>
    %63 = vector.extract_strided_slice %8 {offsets = [12, 0], sizes = [6, 256], strides = [1, 1]} : vector<50x256xf32> to vector<6x256xf32>
    %cst_15 = arith.constant 0.000000e+00 : f32
    %64 = vector.shape_cast %62 : vector<1x256xi1> to vector<1x256xi1>
    %65 = vector.broadcast %64 : vector<1x256xi1> to vector<6x256xi1>
    %66 = vector.broadcast %cst_15 : f32 to vector<6x256xf32>
    %67 = arith.select %65, %63, %66 : vector<6x256xi1>, vector<6x256xf32>
    %68 = vector.extract_strided_slice %67 {offsets = [0, 0], sizes = [2, 256], strides = [1, 1]} : vector<6x256xf32> to vector<2x256xf32>
    %cst_16 = arith.constant 0.000000e+00 : f32
    %69 = vector.broadcast %cst_16 : f32 to vector<2x15xf32>
    %70 = vector.extract_strided_slice %68 {offsets = [0, 0], sizes = [2, 241], strides = [1, 1]} : vector<2x256xf32> to vector<2x241xf32>
    %71 = tpu.concatenate %69, %70 in 1 : vector<2x15xf32>, vector<2x241xf32> -> vector<2x256xf32>
    %72 = arith.addf %60, %71 : vector<2x256xf32>
    %73 = vector.extract_strided_slice %67 {offsets = [2, 0], sizes = [2, 256], strides = [1, 1]} : vector<6x256xf32> to vector<2x256xf32>
    %74 = vector.extract_strided_slice %73 {offsets = [0, 1], sizes = [2, 255], strides = [1, 1]} : vector<2x256xf32> to vector<2x255xf32>
    %cst_17 = arith.constant 0.000000e+00 : f32
    %75 = vector.broadcast %cst_17 : f32 to vector<2x1xf32>
    %76 = tpu.concatenate %74, %75 in 1 : vector<2x255xf32>, vector<2x1xf32> -> vector<2x256xf32>
    %77 = arith.addf %72, %76 : vector<2x256xf32>
    %78 = vector.extract_strided_slice %67 {offsets = [4, 0], sizes = [2, 256], strides = [1, 1]} : vector<6x256xf32> to vector<2x256xf32>
    %79 = vector.extract_strided_slice %78 {offsets = [0, 17], sizes = [2, 239], strides = [1, 1]} : vector<2x256xf32> to vector<2x239xf32>
    %cst_18 = arith.constant 0.000000e+00 : f32
    %80 = vector.broadcast %cst_18 : f32 to vector<2x17xf32>
    %81 = tpu.concatenate %79, %80 in 1 : vector<2x239xf32>, vector<2x17xf32> -> vector<2x256xf32>
    %82 = arith.addf %77, %81 : vector<2x256xf32>
    %83 = vector.extract_strided_slice %8 {offsets = [18, 0], sizes = [2, 256], strides = [1, 1]} : vector<50x256xf32> to vector<2x256xf32>
    %cst_19 = arith.constant 0.000000e+00 : f32
    %84 = vector.broadcast %cst_19 : f32 to vector<2x32xf32>
    %85 = vector.extract_strided_slice %83 {offsets = [0, 0], sizes = [2, 224], strides = [1, 1]} : vector<2x256xf32> to vector<2x224xf32>
    %86 = tpu.concatenate %84, %85 in 1 : vector<2x32xf32>, vector<2x224xf32> -> vector<2x256xf32>
    %87 = arith.addf %82, %86 : vector<2x256xf32>
    %88 = vector.extract_strided_slice %8 {offsets = [20, 0], sizes = [2, 256], strides = [1, 1]} : vector<50x256xf32> to vector<2x256xf32>
    %89 = vector.extract_strided_slice %88 {offsets = [0, 32], sizes = [2, 224], strides = [1, 1]} : vector<2x256xf32> to vector<2x224xf32>
    %cst_20 = arith.constant 0.000000e+00 : f32
    %90 = vector.broadcast %cst_20 : f32 to vector<2x32xf32>
    %91 = tpu.concatenate %89, %90 in 1 : vector<2x224xf32>, vector<2x32xf32> -> vector<2x256xf32>
    %92 = arith.addf %87, %91 : vector<2x256xf32>
    %c14_i32 = arith.constant 14 : i32
    %93 = vector.broadcast %c14_i32 : i32 to vector<1x256xi32>
    %94 = arith.cmpi slt, %25, %93 : vector<1x256xi32>
    %95 = vector.extract_strided_slice %8 {offsets = [22, 0], sizes = [6, 256], strides = [1, 1]} : vector<50x256xf32> to vector<6x256xf32>
    %cst_21 = arith.constant 0.000000e+00 : f32
    %96 = vector.shape_cast %94 : vector<1x256xi1> to vector<1x256xi1>
    %97 = vector.broadcast %96 : vector<1x256xi1> to vector<6x256xi1>
    %98 = vector.broadcast %cst_21 : f32 to vector<6x256xf32>
    %99 = arith.select %97, %95, %98 : vector<6x256xi1>, vector<6x256xf32>
    %100 = vector.extract_strided_slice %99 {offsets = [0, 0], sizes = [2, 256], strides = [1, 1]} : vector<6x256xf32> to vector<2x256xf32>
    %cst_22 = arith.constant 0.000000e+00 : f32
    %101 = vector.broadcast %cst_22 : f32 to vector<2x34xf32>
    %102 = vector.extract_strided_slice %100 {offsets = [0, 0], sizes = [2, 222], strides = [1, 1]} : vector<2x256xf32> to vector<2x222xf32>
    %103 = tpu.concatenate %101, %102 in 1 : vector<2x34xf32>, vector<2x222xf32> -> vector<2x256xf32>
    %104 = arith.addf %92, %103 : vector<2x256xf32>
    %105 = vector.extract_strided_slice %99 {offsets = [2, 0], sizes = [2, 256], strides = [1, 1]} : vector<6x256xf32> to vector<2x256xf32>
    %cst_23 = arith.constant 0.000000e+00 : f32
    %106 = vector.broadcast %cst_23 : f32 to vector<2x2xf32>
    %107 = vector.extract_strided_slice %105 {offsets = [0, 0], sizes = [2, 254], strides = [1, 1]} : vector<2x256xf32> to vector<2x254xf32>
    %108 = tpu.concatenate %106, %107 in 1 : vector<2x2xf32>, vector<2x254xf32> -> vector<2x256xf32>
    %109 = arith.addf %104, %108 : vector<2x256xf32>
    %110 = vector.extract_strided_slice %99 {offsets = [4, 0], sizes = [2, 256], strides = [1, 1]} : vector<6x256xf32> to vector<2x256xf32>
    %111 = vector.extract_strided_slice %110 {offsets = [0, 30], sizes = [2, 226], strides = [1, 1]} : vector<2x256xf32> to vector<2x226xf32>
    %cst_24 = arith.constant 0.000000e+00 : f32
    %112 = vector.broadcast %cst_24 : f32 to vector<2x30xf32>
    %113 = tpu.concatenate %111, %112 in 1 : vector<2x226xf32>, vector<2x30xf32> -> vector<2x256xf32>
    %114 = arith.addf %109, %113 : vector<2x256xf32>
    %c2_i32 = arith.constant 2 : i32
    %115 = vector.broadcast %c2_i32 : i32 to vector<1x256xi32>
    %116 = arith.cmpi sge, %25, %115 : vector<1x256xi32>
    %117 = vector.extract_strided_slice %8 {offsets = [28, 0], sizes = [6, 256], strides = [1, 1]} : vector<50x256xf32> to vector<6x256xf32>
    %cst_25 = arith.constant 0.000000e+00 : f32
    %118 = vector.shape_cast %116 : vector<1x256xi1> to vector<1x256xi1>
    %119 = vector.broadcast %118 : vector<1x256xi1> to vector<6x256xi1>
    %120 = vector.broadcast %cst_25 : f32 to vector<6x256xf32>
    %121 = arith.select %119, %117, %120 : vector<6x256xi1>, vector<6x256xf32>
    %122 = vector.extract_strided_slice %121 {offsets = [0, 0], sizes = [2, 256], strides = [1, 1]} : vector<6x256xf32> to vector<2x256xf32>
    %cst_26 = arith.constant 0.000000e+00 : f32
    %123 = vector.broadcast %cst_26 : f32 to vector<2x30xf32>
    %124 = vector.extract_strided_slice %122 {offsets = [0, 0], sizes = [2, 226], strides = [1, 1]} : vector<2x256xf32> to vector<2x226xf32>
    %125 = tpu.concatenate %123, %124 in 1 : vector<2x30xf32>, vector<2x226xf32> -> vector<2x256xf32>
    %126 = arith.addf %114, %125 : vector<2x256xf32>
    %127 = vector.extract_strided_slice %121 {offsets = [2, 0], sizes = [2, 256], strides = [1, 1]} : vector<6x256xf32> to vector<2x256xf32>
    %128 = vector.extract_strided_slice %127 {offsets = [0, 2], sizes = [2, 254], strides = [1, 1]} : vector<2x256xf32> to vector<2x254xf32>
    %cst_27 = arith.constant 0.000000e+00 : f32
    %129 = vector.broadcast %cst_27 : f32 to vector<2x2xf32>
    %130 = tpu.concatenate %128, %129 in 1 : vector<2x254xf32>, vector<2x2xf32> -> vector<2x256xf32>
    %131 = arith.addf %126, %130 : vector<2x256xf32>
    %132 = vector.extract_strided_slice %121 {offsets = [4, 0], sizes = [2, 256], strides = [1, 1]} : vector<6x256xf32> to vector<2x256xf32>
    %133 = vector.extract_strided_slice %132 {offsets = [0, 34], sizes = [2, 222], strides = [1, 1]} : vector<2x256xf32> to vector<2x222xf32>
    %cst_28 = arith.constant 0.000000e+00 : f32
    %134 = vector.broadcast %cst_28 : f32 to vector<2x34xf32>
    %135 = tpu.concatenate %133, %134 in 1 : vector<2x222xf32>, vector<2x34xf32> -> vector<2x256xf32>
    %136 = arith.addf %131, %135 : vector<2x256xf32>
    %137 = vector.extract_strided_slice %8 {offsets = [34, 0], sizes = [2, 256], strides = [1, 1]} : vector<50x256xf32> to vector<2x256xf32>
    %cst_29 = arith.constant 0.000000e+00 : f32
    %138 = vector.broadcast %cst_29 : f32 to vector<2x48xf32>
    %139 = vector.extract_strided_slice %137 {offsets = [0, 0], sizes = [2, 208], strides = [1, 1]} : vector<2x256xf32> to vector<2x208xf32>
    %140 = tpu.concatenate %138, %139 in 1 : vector<2x48xf32>, vector<2x208xf32> -> vector<2x256xf32>
    %141 = arith.addf %136, %140 : vector<2x256xf32>
    %142 = vector.extract_strided_slice %8 {offsets = [36, 0], sizes = [2, 256], strides = [1, 1]} : vector<50x256xf32> to vector<2x256xf32>
    %143 = vector.extract_strided_slice %142 {offsets = [0, 48], sizes = [2, 208], strides = [1, 1]} : vector<2x256xf32> to vector<2x208xf32>
    %cst_30 = arith.constant 0.000000e+00 : f32
    %144 = vector.broadcast %cst_30 : f32 to vector<2x48xf32>
    %145 = tpu.concatenate %143, %144 in 1 : vector<2x208xf32>, vector<2x48xf32> -> vector<2x256xf32>
    %146 = arith.addf %141, %145 : vector<2x256xf32>
    %c13_i32 = arith.constant 13 : i32
    %147 = vector.broadcast %c13_i32 : i32 to vector<1x256xi32>
    %148 = arith.cmpi slt, %25, %147 : vector<1x256xi32>
    %149 = vector.extract_strided_slice %8 {offsets = [38, 0], sizes = [6, 256], strides = [1, 1]} : vector<50x256xf32> to vector<6x256xf32>
    %cst_31 = arith.constant 0.000000e+00 : f32
    %150 = vector.shape_cast %148 : vector<1x256xi1> to vector<1x256xi1>
    %151 = vector.broadcast %150 : vector<1x256xi1> to vector<6x256xi1>
    %152 = vector.broadcast %cst_31 : f32 to vector<6x256xf32>
    %153 = arith.select %151, %149, %152 : vector<6x256xi1>, vector<6x256xf32>
    %154 = vector.extract_strided_slice %153 {offsets = [0, 0], sizes = [2, 256], strides = [1, 1]} : vector<6x256xf32> to vector<2x256xf32>
    %cst_32 = arith.constant 0.000000e+00 : f32
    %155 = vector.broadcast %cst_32 : f32 to vector<2x51xf32>
    %156 = vector.extract_strided_slice %154 {offsets = [0, 0], sizes = [2, 205], strides = [1, 1]} : vector<2x256xf32> to vector<2x205xf32>
    %157 = tpu.concatenate %155, %156 in 1 : vector<2x51xf32>, vector<2x205xf32> -> vector<2x256xf32>
    %158 = arith.addf %146, %157 : vector<2x256xf32>
    %159 = vector.extract_strided_slice %153 {offsets = [2, 0], sizes = [2, 256], strides = [1, 1]} : vector<6x256xf32> to vector<2x256xf32>
    %cst_33 = arith.constant 0.000000e+00 : f32
    %160 = vector.broadcast %cst_33 : f32 to vector<2x3xf32>
    %161 = vector.extract_strided_slice %159 {offsets = [0, 0], sizes = [2, 253], strides = [1, 1]} : vector<2x256xf32> to vector<2x253xf32>
    %162 = tpu.concatenate %160, %161 in 1 : vector<2x3xf32>, vector<2x253xf32> -> vector<2x256xf32>
    %163 = arith.addf %158, %162 : vector<2x256xf32>
    %164 = vector.extract_strided_slice %153 {offsets = [4, 0], sizes = [2, 256], strides = [1, 1]} : vector<6x256xf32> to vector<2x256xf32>
    %165 = vector.extract_strided_slice %164 {offsets = [0, 45], sizes = [2, 211], strides = [1, 1]} : vector<2x256xf32> to vector<2x211xf32>
    %cst_34 = arith.constant 0.000000e+00 : f32
    %166 = vector.broadcast %cst_34 : f32 to vector<2x45xf32>
    %167 = tpu.concatenate %165, %166 in 1 : vector<2x211xf32>, vector<2x45xf32> -> vector<2x256xf32>
    %168 = arith.addf %163, %167 : vector<2x256xf32>
    %c3_i32 = arith.constant 3 : i32
    %169 = vector.broadcast %c3_i32 : i32 to vector<1x256xi32>
    %170 = arith.cmpi sge, %25, %169 : vector<1x256xi32>
    %171 = vector.extract_strided_slice %8 {offsets = [44, 0], sizes = [6, 256], strides = [1, 1]} : vector<50x256xf32> to vector<6x256xf32>
    %cst_35 = arith.constant 0.000000e+00 : f32
    %172 = vector.shape_cast %170 : vector<1x256xi1> to vector<1x256xi1>
    %173 = vector.broadcast %172 : vector<1x256xi1> to vector<6x256xi1>
    %174 = vector.broadcast %cst_35 : f32 to vector<6x256xf32>
    %175 = arith.select %173, %171, %174 : vector<6x256xi1>, vector<6x256xf32>
    %176 = vector.extract_strided_slice %175 {offsets = [0, 0], sizes = [2, 256], strides = [1, 1]} : vector<6x256xf32> to vector<2x256xf32>
    %cst_36 = arith.constant 0.000000e+00 : f32
    %177 = vector.broadcast %cst_36 : f32 to vector<2x45xf32>
    %178 = vector.extract_strided_slice %176 {offsets = [0, 0], sizes = [2, 211], strides = [1, 1]} : vector<2x256xf32> to vector<2x211xf32>
    %179 = tpu.concatenate %177, %178 in 1 : vector<2x45xf32>, vector<2x211xf32> -> vector<2x256xf32>
    %180 = arith.addf %168, %179 : vector<2x256xf32>
    %181 = vector.extract_strided_slice %175 {offsets = [2, 0], sizes = [2, 256], strides = [1, 1]} : vector<6x256xf32> to vector<2x256xf32>
    %182 = vector.extract_strided_slice %181 {offsets = [0, 3], sizes = [2, 253], strides = [1, 1]} : vector<2x256xf32> to vector<2x253xf32>
    %cst_37 = arith.constant 0.000000e+00 : f32
    %183 = vector.broadcast %cst_37 : f32 to vector<2x3xf32>
    %184 = tpu.concatenate %182, %183 in 1 : vector<2x253xf32>, vector<2x3xf32> -> vector<2x256xf32>
    %185 = arith.addf %180, %184 : vector<2x256xf32>
    %186 = vector.extract_strided_slice %175 {offsets = [4, 0], sizes = [2, 256], strides = [1, 1]} : vector<6x256xf32> to vector<2x256xf32>
    %187 = vector.extract_strided_slice %186 {offsets = [0, 51], sizes = [2, 205], strides = [1, 1]} : vector<2x256xf32> to vector<2x205xf32>
    %cst_38 = arith.constant 0.000000e+00 : f32
    %188 = vector.broadcast %cst_38 : f32 to vector<2x51xf32>
    %189 = tpu.concatenate %187, %188 in 1 : vector<2x205xf32>, vector<2x51xf32> -> vector<2x256xf32>
    %190 = arith.addf %185, %189 : vector<2x256xf32>
    %cst_39 = arith.constant 1.000000e+00 : f32
    %191 = vector.broadcast %cst_39 : f32 to vector<2x256xf32>
    %192 = arith.addf %190, %191 : vector<2x256xf32>
    %193 = vector.extract_strided_slice %1 {offsets = [0, 0], sizes = [4, 256], strides = [1, 1]} : vector<8x256xf32> to vector<4x256xf32>
    %194 = vector.extract_strided_slice %192 {offsets = [0, 0], sizes = [1, 256], strides = [1, 1]} : vector<2x256xf32> to vector<1x256xf32>
    %195 = vector.broadcast %194 : vector<1x256xf32> to vector<4x256xf32>
    %196 = arith.mulf %193, %195 : vector<4x256xf32>
    %c0_40 = arith.constant 0 : index
    %c0_41 = arith.constant 0 : index
    %197 = vector.load %arg4[%c0_40, %c0_41] : memref<8x256xf32, #tpu.memory_space<vmem>>, vector<4x256xf32>
    tpu.vector_store %arg4[%c0_40, %c0_41], %196 {strides = array<i32>} : memref<8x256xf32, #tpu.memory_space<vmem>>, vector<4x256xf32>,
    %198 = vector.extract_strided_slice %1 {offsets = [4, 0], sizes = [4, 256], strides = [1, 1]} : vector<8x256xf32> to vector<4x256xf32>
    %199 = vector.extract_strided_slice %192 {offsets = [1, 0], sizes = [1, 256], strides = [1, 1]} : vector<2x256xf32> to vector<1x256xf32>
    %200 = vector.broadcast %199 : vector<1x256xf32> to vector<4x256xf32>
    %201 = arith.mulf %198, %200 : vector<4x256xf32>
    %c4 = arith.constant 4 : index
    %c0_42 = arith.constant 0 : index
    %202 = vector.load %arg4[%c4, %c0_42] : memref<8x256xf32, #tpu.memory_space<vmem>>, vector<4x256xf32>
    tpu.vector_store %arg4[%c4, %c0_42], %201 {strides = array<i32>} : memref<8x256xf32, #tpu.memory_space<vmem>>, vector<4x256xf32>,
    return
  }
  func.func @transform_0(%arg0: i32) -> (i32, i32) {
    %c0_i32 = arith.constant 0 : i32
    %c0_i32_0 = arith.constant 0 : i32
    %c0_i32_1 = arith.constant 0 : i32
    return %c0_i32, %c0_i32_0 : i32, i32
  }
  func.func @transform_1(%arg0: i32) -> (i32, i32) {
    %c0_i32 = arith.constant 0 : i32
    %c0_i32_0 = arith.constant 0 : i32
    %c0_i32_1 = arith.constant 0 : i32
    return %c0_i32, %c0_i32_0 : i32, i32
  }
  func.func @transform_2(%arg0: i32) -> (i32, i32) {
    %c0_i32 = arith.constant 0 : i32
    %c0_i32_0 = arith.constant 0 : i32
    %c0_i32_1 = arith.constant 0 : i32
    return %c0_i32, %c0_i32_0 : i32, i32
  }
  func.func @transform_3(%arg0: i32) -> (i32, i32) {
    %c0_i32 = arith.constant 0 : i32
    %c0_i32_0 = arith.constant 0 : i32
    %c0_i32_1 = arith.constant 0 : i32
    return %c0_i32, %c0_i32_0 : i32, i32
  }
}

</mosaic_0001>

<llo_original>
// kernel: tpu_custom_call.1
$region0: #{tpu_custom_call.1}
  #allocation0 [shape = 'u32[]', space=smem, size = 0x4, offset = 0x4, fixed_abs, tag = 'smem constant byte address 0x4 - core index']
  #allocation1 [shape = 'u32[72,128]{1,0:T(1,128)}', space=vmem, size = 0x9000, scoped, tag = 'internal scratch']
  %s0 = inlined_call_operand.vmem [shape: f32[8,256], index: 0, kind: input, shape index: {}]
  %s1 = inlined_call_operand.vmem [shape: f32[8,256], index: 1, kind: input, shape index: {}]
  %s2 = inlined_call_operand.vmem [shape: f32[56,16], index: 2, kind: input, shape index: {}]
  %s3 = inlined_call_operand.hbm [shape: f32[8,256], index: 3, kind: output, shape index: {}]
  %s4 = sld [smem:[#allocation0]]
  $region22: #{tpu_custom_call.1} parent=0
    _
  %s6 = ssub.s32 1, %s4
  %s7 = scalar_select 0, %s6, %s4
  $region1: #{tpu_custom_call.1} parent=0
    #allocation2 [shape = 'u8[8192]{0}', space=vmem, size = 0x2000, scoped, tag = 'output window, operand 0, single buffered']
    #allocation3 [shape = 's32[1]{0}', space=sflag, size = 0x4, scoped, tag = 'scoped memory for tpu_custom_call.1']
    %8 = vsyncpa [#allocation3], 0
    // Predicated region
    $region2: #{tpu_custom_call.1} parent=1 // pred_check
      _
    $region3: #{tpu_custom_call.1} parent=1 // pred_check_branch
      %10 = sbr.rel (0) target = $region5
    $region4: #{tpu_custom_call.1} parent=1 // pred_region
      _
    $region5: #{tpu_custom_call.1} parent=1 // pred_fallthru
      _
    // Predicated region
    $region6: #{tpu_custom_call.1} parent=1 // pred_check
      _
    $region7: #{tpu_custom_call.1} parent=1 // pred_check_branch
      %12 = sbr.rel (0) target = $region9
    $region8: #{tpu_custom_call.1} parent=1 // pred_region
      _
    $region9: #{tpu_custom_call.1} parent=1 // pred_fallthru
      _
    // Predicated region
    $region10: #{tpu_custom_call.1} parent=1 // pred_check
      _
    $region11: #{tpu_custom_call.1} parent=1 // pred_check_branch
      %14 = sbr.rel (0) target = $region13
    $region12: #{tpu_custom_call.1} parent=1 // pred_region
      _
    $region13: #{tpu_custom_call.1} parent=1 // pred_fallthru
      _
    %v15 = vld [vmem:[%s0] sm:$0xff]
    %v16 = vld [vmem:[%s0 + $0x8] sm:$0xff]
    %v17 = vld [vmem:[%s1] sm:$0xff]
    %v18 = vld [vmem:[%s1 + $0x8] sm:$0xff]
    %v19 = vld [vmem:[%s2] sm:$0xff]
    %v20 = vld [vmem:[%s2 + $0x8] sm:$0xff]
    %v21 = vld [vmem:[%s2 + $0x10] sm:$0xff]
    %v22 = vld [vmem:[%s2 + $0x18] sm:$0xff]
    %v23 = vld [vmem:[%s2 + $0x20] sm:$0xff]
    %v24 = vld [vmem:[%s2 + $0x28] sm:$0xff]
    %v25 = vld [vmem:[%s2 + $0x30] sm:$0xff]
    %27 = vset.pattern.permute.xlu0 8
    %28 = vperm.xlu0 %27, %v19
    %v29 = vpop.permute.xlu0 %28
    %32 = vset.pattern.permute.xlu0 8
    %33 = vperm.xlu0 %32, %v20
    %v34 = vpop.permute.xlu0 %33
    %37 = vset.pattern.permute.xlu0 8
    %38 = vperm.xlu0 %37, %v21
    %v39 = vpop.permute.xlu0 %38
    %42 = vset.pattern.permute.xlu0 8
    %43 = vperm.xlu0 %42, %v22
    %v44 = vpop.permute.xlu0 %43
    %47 = vset.pattern.permute.xlu0 8
    %48 = vperm.xlu0 %47, %v23
    %v49 = vpop.permute.xlu0 %48
    %52 = vset.pattern.permute.xlu0 8
    %53 = vperm.xlu0 %52, %v24
    %v54 = vpop.permute.xlu0 %53
    %57 = vset.pattern.permute.xlu0 8
    %58 = vperm.xlu0 %57, %v25
    %v59 = vpop.permute.xlu0 %58
    %vm61 = vcmask 64512
    %v62 = vsel %vm61, %v19, 0
    %v64 = vsel %vm61, %v20, 0
    %v66 = vsel %vm61, %v21, 0
    %v68 = vsel %vm61, %v22, 0
    %v70 = vsel %vm61, %v23, 0
    %v72 = vsel %vm61, %v24, 0
    %v74 = vsel %vm61, %v25, 0
    %76 = vmatpush.msra.mxu0 0.0
    %77 = vmatpush.msra.mxu0 0.0
    %78 = vmatpush.msra.mxu0 0.0
    %79 = vmatpush.msra.mxu0 0.0
    %80 = vmatpush.msra.mxu0 0.0
    %81 = vmatpush.msra.mxu0 0.0
    %82 = vmatpush.msra.mxu0 0.0
    %83 = vmatpush.msra.mxu0 0.0
    %84 = vmatpush.msra.mxu0 0.0
    %85 = vmatpush.msra.mxu0 0.0
    %86 = vmatpush.msra.mxu0 0.0
    %87 = vmatpush.msra.mxu0 0.0
    %88 = vmatpush.msra.mxu0 0.0
    %89 = vmatpush.msra.mxu0 0.0
    %90 = vmatpush.msra.mxu0 0.0
    %91 = vmatpush.msra.mxu0 %v15
    %92 = vmatmul.f32.gmra.mxu0 %v62
    %v93 = vpop.f32.mrf.mxu0
    %v94 = vadd.f32 %v29, %v93
    %95 = vmatmul.f32.gmra.mxu0 %v64
    %v96 = vpop.f32.mrf.mxu0
    %v97 = vadd.f32 %v34, %v96
    %98 = vmatmul.f32.gmra.mxu0 %v66
    %v99 = vpop.f32.mrf.mxu0
    %v100 = vadd.f32 %v39, %v99
    %101 = vmatmul.f32.gmra.mxu0 %v68
    %v102 = vpop.f32.mrf.mxu0
    %v103 = vadd.f32 %v44, %v102
    %104 = vmatmul.f32.gmra.mxu0 %v70
    %v105 = vpop.f32.mrf.mxu0
    %v106 = vadd.f32 %v49, %v105
    %107 = vmatmul.f32.gmra.mxu0 %v72
    %v108 = vpop.f32.mrf.mxu0
    %v109 = vadd.f32 %v54, %v108
    %110 = vmatmul.f32.gmra.mxu0 %v74
    %v111 = vpop.f32.mrf.mxu0
    %v112 = vadd.f32 %v59, %v111
    %113 = vdwg.mxu0
    %114 = vmatpush.msra.mxu0 0.0
    %115 = vmatpush.msra.mxu0 0.0
    %116 = vmatpush.msra.mxu0 0.0
    %117 = vmatpush.msra.mxu0 0.0
    %118 = vmatpush.msra.mxu0 0.0
    %119 = vmatpush.msra.mxu0 0.0
    %120 = vmatpush.msra.mxu0 0.0
    %121 = vmatpush.msra.mxu0 0.0
    %122 = vmatpush.msra.mxu0 0.0
    %123 = vmatpush.msra.mxu0 0.0
    %124 = vmatpush.msra.mxu0 0.0
    %125 = vmatpush.msra.mxu0 0.0
    %126 = vmatpush.msra.mxu0 0.0
    %127 = vmatpush.msra.mxu0 0.0
    %128 = vmatpush.msra.mxu0 0.0
    %129 = vmatpush.msra.mxu0 %v16
    %130 = vmatmul.f32.gmra.mxu0 %v62
    %v131 = vpop.f32.mrf.mxu0
    %v132 = vadd.f32 %v29, %v131
    %133 = vmatmul.f32.gmra.mxu0 %v64
    %v134 = vpop.f32.mrf.mxu0
    %v135 = vadd.f32 %v34, %v134
    %136 = vmatmul.f32.gmra.mxu0 %v66
    %v137 = vpop.f32.mrf.mxu0
    %v138 = vadd.f32 %v39, %v137
    %139 = vmatmul.f32.gmra.mxu0 %v68
    %v140 = vpop.f32.mrf.mxu0
    %v141 = vadd.f32 %v44, %v140
    %142 = vmatmul.f32.gmra.mxu0 %v70
    %v143 = vpop.f32.mrf.mxu0
    %v144 = vadd.f32 %v49, %v143
    %145 = vmatmul.f32.gmra.mxu0 %v72
    %v146 = vpop.f32.mrf.mxu0
    %v147 = vadd.f32 %v54, %v146
    %148 = vmatmul.f32.gmra.mxu0 %v74
    %v149 = vpop.f32.mrf.mxu0
    %v150 = vadd.f32 %v59, %v149
    %151 = vdwg.mxu0
    %v152 = vlaneseq
    %v153 = vand.u32 %v152, 127
    %v154 = vadd.s32 %v153, 128
    %vm155 = vcmp.lt.s32.totalorder %v153, 0
    %v156 = vsub.s32 0, %v153
    %v157 = vsel %vm155, %v156, %v153
    %v158 = vshrl.u32 %v157, 4
    %v159 = vand.u32 %v157, 15
    %v160 = vsub.s32 0, %v159
    %v161 = vsel %vm155, %v160, %v159
    %vm162 = vcmp.lt.s32.totalorder %v154, 0
    %v163 = vsub.s32 0, %v154
    %v164 = vsel %vm162, %v163, %v154
    %v165 = vshrl.u32 %v164, 4
    %v166 = vand.u32 %v164, 15
    %v167 = vsub.s32 0, %v166
    %v168 = vsel %vm162, %v167, %v166
    %vm169 = vcmp.ne.s32.totalorder %v161, 0
    %vm170 = vcmp.ne.s32.totalorder %v168, 0
    %vm171 = vcmp.lt.s32.totalorder %v161, 0
    %vm172 = vcmp.lt.s32.totalorder %v168, 0
    %vm173 = vmand %vm171, %vm169
    %vm174 = vmand %vm172, %vm170
    %v175 = vadd.s32 %v161, 16
    %v176 = vadd.s32 %v168, 16
    %v177 = vsel %vm173, %v175, %v161
    %v178 = vsel %vm174, %v176, %v168
    %179 = vrot.lane.b32.xlu0 %v19, 119
    %v180 = vpop.permute.xlu0 %179
    %s181 = vtos %v180
    %v182 = vstv %s181
    %v184 = vadd.f32 %v94, %v182
    %v185 = vadd.f32 %v132, %v182
    %v188 = vrot.slane %v94, 2
    %v189 = vrot.slane %v132, 2
    %190 = vrot.lane.b32.xlu0 %v188, 16
    %v191 = vpop.permute.xlu0 %190
    %192 = vrot.lane.b32.xlu0 %v189, 16
    %v193 = vpop.permute.xlu0 %192
    %vm194 = vcmask 130048
    %v195 = vsel %vm194, %v191, %v193
    %v198 = vsel %vm194, 0.0, %v191
    %v199 = vadd.f32 %v184, %v198
    %v200 = vadd.f32 %v185, %v195
    %201 = vrot.lane.b32.xlu0 %v94, 112
    %v202 = vpop.permute.xlu0 %201
    %203 = vrot.lane.b32.xlu0 %v132, 112
    %v204 = vpop.permute.xlu0 %203
    %vm205 = vcmask 916480
    %v206 = vsel %vm205, %v202, %v204
    %v208 = vsel %vm205, %v204, 0.0
    %v210 = vrot.slane %v206, 4
    %v211 = vrot.slane %v208, 4
    %v214 = vadd.f32 %v199, %v210
    %v215 = vadd.f32 %v200, %v211
    %vm216 = vcmp.lt.s32.totalorder %v177, 15
    %vm217 = vcmp.lt.s32.totalorder %v178, 15
    %v218 = vsel %vm216, 1, 0
    %v219 = vsel %vm217, 1, 0
    %vm220 = vcmp.eq.s32.totalorder %v218, 1
    %vm221 = vcmp.eq.s32.totalorder %v219, 1
    %v222 = vsel %vm220, %v94, 0.0
    %v223 = vsel %vm221, %v132, 0.0
    %v224 = vsel %vm220, %v97, 0.0
    %v225 = vsel %vm221, %v135, 0.0
    %v228 = vrot.slane %v222, 6
    %v229 = vrot.slane %v223, 6
    %230 = vrot.lane.b32.xlu0 %v228, 17
    %v231 = vpop.permute.xlu0 %230
    %232 = vrot.lane.b32.xlu0 %v229, 17
    %v233 = vpop.permute.xlu0 %232
    %vm234 = vcmask 138240
    %v235 = vsel %vm234, %v231, %v233
    %v238 = vsel %vm234, 0.0, %v231
    %v239 = vadd.f32 %v214, %v238
    %v240 = vadd.f32 %v215, %v235
    %243 = vrot.lane.b32.xlu0 %v224, 1
    %v244 = vpop.permute.xlu0 %243
    %245 = vrot.lane.b32.xlu0 %v225, 1
    %v246 = vpop.permute.xlu0 %245
    %vm247 = vcmask 7168
    %v248 = vsel %vm247, %v244, %v246
    %v251 = vsel %vm247, 0.0, %v244
    %v252 = vadd.f32 %v239, %v251
    %v253 = vadd.f32 %v240, %v248
    %254 = vrot.lane.b32.xlu0 %v224, 113
    %v255 = vpop.permute.xlu0 %254
    %256 = vrot.lane.b32.xlu0 %v225, 113
    %v257 = vpop.permute.xlu0 %256
    %vm258 = vcmask 924672
    %v259 = vsel %vm258, %v255, %v257
    %v261 = vsel %vm258, %v257, 0.0
    %v263 = vrot.slane %v259, 2
    %v264 = vrot.slane %v261, 2
    %v267 = vadd.f32 %v252, %v263
    %v268 = vadd.f32 %v253, %v264
    %vm269 = vcmp.ge.s32.totalorder %v177, 1
    %vm270 = vcmp.ge.s32.totalorder %v178, 1
    %v271 = vsel %vm269, 1, 0
    %v272 = vsel %vm270, 1, 0
    %vm273 = vcmp.eq.s32.totalorder %v271, 1
    %vm274 = vcmp.eq.s32.totalorder %v272, 1
    %v275 = vsel %vm273, %v97, 0.0
    %v276 = vsel %vm274, %v135, 0.0
    %v277 = vsel %vm273, %v100, 0.0
    %v278 = vsel %vm274, %v138, 0.0
    %v281 = vrot.slane %v275, 4
    %v282 = vrot.slane %v276, 4
    %283 = vrot.lane.b32.xlu0 %v281, 15
    %v284 = vpop.permute.xlu0 %283
    %285 = vrot.lane.b32.xlu0 %v282, 15
    %v286 = vpop.permute.xlu0 %285
    %vm287 = vcmask 121856
    %v288 = vsel %vm287, %v284, %v286
    %v291 = vsel %vm287, 0.0, %v284
    %v292 = vadd.f32 %v267, %v291
    %v293 = vadd.f32 %v268, %v288
    %294 = vrot.lane.b32.xlu0 %v275, 127
    %v295 = vpop.permute.xlu0 %294
    %296 = vrot.lane.b32.xlu0 %v276, 127
    %v297 = vpop.permute.xlu0 %296
    %vm298 = vcmask 1039360
    %v299 = vsel %vm298, %v295, %v297
    %v301 = vsel %vm298, %v297, 0.0
    %v303 = vrot.slane %v299, 6
    %v304 = vrot.slane %v301, 6
    %v307 = vadd.f32 %v292, %v303
    %v308 = vadd.f32 %v293, %v304
    %311 = vrot.lane.b32.xlu0 %v277, 111
    %v312 = vpop.permute.xlu0 %311
    %313 = vrot.lane.b32.xlu0 %v278, 111
    %v314 = vpop.permute.xlu0 %313
    %vm315 = vcmask 908288
    %v316 = vsel %vm315, %v312, %v314
    %v319 = vsel %vm315, %v314, 0.0
    %v320 = vadd.f32 %v307, %v316
    %v321 = vadd.f32 %v308, %v319
    %v324 = vrot.slane %v100, 2
    %v325 = vrot.slane %v138, 2
    %326 = vrot.lane.b32.xlu0 %v324, 32
    %v327 = vpop.permute.xlu0 %326
    %328 = vrot.lane.b32.xlu0 %v325, 32
    %v329 = vpop.permute.xlu0 %328
    %vm330 = vcmask 261120
    %v331 = vsel %vm330, %v327, %v329
    %v334 = vsel %vm330, 0.0, %v327
    %v335 = vadd.f32 %v320, %v334
    %v336 = vadd.f32 %v321, %v331
    %337 = vrot.lane.b32.xlu0 %v100, 96
    %v338 = vpop.permute.xlu0 %337
    %339 = vrot.lane.b32.xlu0 %v138, 96
    %v340 = vpop.permute.xlu0 %339
    %vm341 = vcmask 785408
    %v342 = vsel %vm341, %v338, %v340
    %v344 = vsel %vm341, %v340, 0.0
    %v346 = vrot.slane %v342, 4
    %v347 = vrot.slane %v344, 4
    %v350 = vadd.f32 %v335, %v346
    %v351 = vadd.f32 %v336, %v347
    %vm352 = vcmp.lt.s32.totalorder %v177, 14
    %vm353 = vcmp.lt.s32.totalorder %v178, 14
    %v354 = vsel %vm352, 1, 0
    %v355 = vsel %vm353, 1, 0
    %vm356 = vcmp.eq.s32.totalorder %v354, 1
    %vm357 = vcmp.eq.s32.totalorder %v355, 1
    %v358 = vsel %vm356, %v100, 0.0
    %v359 = vsel %vm357, %v138, 0.0
    %v360 = vsel %vm356, %v103, 0.0
    %v361 = vsel %vm357, %v141, 0.0
    %v364 = vrot.slane %v358, 6
    %v365 = vrot.slane %v359, 6
    %366 = vrot.lane.b32.xlu0 %v364, 34
    %v367 = vpop.permute.xlu0 %366
    %368 = vrot.lane.b32.xlu0 %v365, 34
    %v369 = vpop.permute.xlu0 %368
    %vm370 = vcmask 277504
    %v371 = vsel %vm370, %v367, %v369
    %v374 = vsel %vm370, 0.0, %v367
    %v375 = vadd.f32 %v350, %v374
    %v376 = vadd.f32 %v351, %v371
    %379 = vrot.lane.b32.xlu0 %v360, 2
    %v380 = vpop.permute.xlu0 %379
    %381 = vrot.lane.b32.xlu0 %v361, 2
    %v382 = vpop.permute.xlu0 %381
    %vm383 = vcmask 15360
    %v384 = vsel %vm383, %v380, %v382
    %v387 = vsel %vm383, 0.0, %v380
    %v388 = vadd.f32 %v375, %v387
    %v389 = vadd.f32 %v376, %v384
    %390 = vrot.lane.b32.xlu0 %v360, 98
    %v391 = vpop.permute.xlu0 %390
    %392 = vrot.lane.b32.xlu0 %v361, 98
    %v393 = vpop.permute.xlu0 %392
    %vm394 = vcmask 801792
    %v395 = vsel %vm394, %v391, %v393
    %v397 = vsel %vm394, %v393, 0.0
    %v399 = vrot.slane %v395, 2
    %v400 = vrot.slane %v397, 2
    %v403 = vadd.f32 %v388, %v399
    %v404 = vadd.f32 %v389, %v400
    %vm405 = vcmp.ge.s32.totalorder %v177, 2
    %vm406 = vcmp.ge.s32.totalorder %v178, 2
    %v407 = vsel %vm405, 1, 0
    %v408 = vsel %vm406, 1, 0
    %vm409 = vcmp.eq.s32.totalorder %v407, 1
    %vm410 = vcmp.eq.s32.totalorder %v408, 1
    %v411 = vsel %vm409, %v103, 0.0
    %v412 = vsel %vm410, %v141, 0.0
    %v413 = vsel %vm409, %v106, 0.0
    %v414 = vsel %vm410, %v144, 0.0
    %v417 = vrot.slane %v411, 4
    %v418 = vrot.slane %v412, 4
    %419 = vrot.lane.b32.xlu0 %v417, 30
    %v420 = vpop.permute.xlu0 %419
    %421 = vrot.lane.b32.xlu0 %v418, 30
    %v422 = vpop.permute.xlu0 %421
    %vm423 = vcmask 244736
    %v424 = vsel %vm423, %v420, %v422
    %v427 = vsel %vm423, 0.0, %v420
    %v428 = vadd.f32 %v403, %v427
    %v429 = vadd.f32 %v404, %v424
    %430 = vrot.lane.b32.xlu0 %v411, 126
    %v431 = vpop.permute.xlu0 %430
    %432 = vrot.lane.b32.xlu0 %v412, 126
    %v433 = vpop.permute.xlu0 %432
    %vm434 = vcmask 1031168
    %v435 = vsel %vm434, %v431, %v433
    %v437 = vsel %vm434, %v433, 0.0
    %v439 = vrot.slane %v435, 6
    %v440 = vrot.slane %v437, 6
    %v443 = vadd.f32 %v428, %v439
    %v444 = vadd.f32 %v429, %v440
    %447 = vrot.lane.b32.xlu0 %v413, 94
    %v448 = vpop.permute.xlu0 %447
    %449 = vrot.lane.b32.xlu0 %v414, 94
    %v450 = vpop.permute.xlu0 %449
    %vm451 = vcmask 769024
    %v452 = vsel %vm451, %v448, %v450
    %v455 = vsel %vm451, %v450, 0.0
    %v456 = vadd.f32 %v443, %v452
    %v457 = vadd.f32 %v444, %v455
    %v460 = vrot.slane %v106, 2
    %v461 = vrot.slane %v144, 2
    %462 = vrot.lane.b32.xlu0 %v460, 48
    %v463 = vpop.permute.xlu0 %462
    %464 = vrot.lane.b32.xlu0 %v461, 48
    %v465 = vpop.permute.xlu0 %464
    %vm466 = vcmask 392192
    %v467 = vsel %vm466, %v463, %v465
    %v470 = vsel %vm466, 0.0, %v463
    %v471 = vadd.f32 %v456, %v470
    %v472 = vadd.f32 %v457, %v467
    %473 = vrot.lane.b32.xlu0 %v106, 80
    %v474 = vpop.permute.xlu0 %473
    %475 = vrot.lane.b32.xlu0 %v144, 80
    %v476 = vpop.permute.xlu0 %475
    %vm477 = vcmask 654336
    %v478 = vsel %vm477, %v474, %v476
    %v480 = vsel %vm477, %v476, 0.0
    %v482 = vrot.slane %v478, 4
    %v483 = vrot.slane %v480, 4
    %v486 = vadd.f32 %v471, %v482
    %v487 = vadd.f32 %v472, %v483
    %vm488 = vcmp.lt.s32.totalorder %v177, 13
    %vm489 = vcmp.lt.s32.totalorder %v178, 13
    %v490 = vsel %vm488, 1, 0
    %v491 = vsel %vm489, 1, 0
    %vm492 = vcmp.eq.s32.totalorder %v490, 1
    %vm493 = vcmp.eq.s32.totalorder %v491, 1
    %v494 = vsel %vm492, %v106, 0.0
    %v495 = vsel %vm493, %v144, 0.0
    %v496 = vsel %vm492, %v109, 0.0
    %v497 = vsel %vm493, %v147, 0.0
    %v500 = vrot.slane %v494, 6
    %v501 = vrot.slane %v495, 6
    %502 = vrot.lane.b32.xlu0 %v500, 51
    %v503 = vpop.permute.xlu0 %502
    %504 = vrot.lane.b32.xlu0 %v501, 51
    %v505 = vpop.permute.xlu0 %504
    %vm506 = vcmask 416768
    %v507 = vsel %vm506, %v503, %v505
    %v510 = vsel %vm506, 0.0, %v503
    %v511 = vadd.f32 %v486, %v510
    %v512 = vadd.f32 %v487, %v507
    %515 = vrot.lane.b32.xlu0 %v496, 3
    %v516 = vpop.permute.xlu0 %515
    %517 = vrot.lane.b32.xlu0 %v497, 3
    %v518 = vpop.permute.xlu0 %517
    %vm519 = vcmask 23552
    %v520 = vsel %vm519, %v516, %v518
    %v523 = vsel %vm519, 0.0, %v516
    %v524 = vadd.f32 %v511, %v523
    %v525 = vadd.f32 %v512, %v520
    %526 = vrot.lane.b32.xlu0 %v496, 83
    %v527 = vpop.permute.xlu0 %526
    %528 = vrot.lane.b32.xlu0 %v497, 83
    %v529 = vpop.permute.xlu0 %528
    %vm530 = vcmask 678912
    %v531 = vsel %vm530, %v527, %v529
    %v533 = vsel %vm530, %v529, 0.0
    %v535 = vrot.slane %v531, 2
    %v536 = vrot.slane %v533, 2
    %v539 = vadd.f32 %v524, %v535
    %v540 = vadd.f32 %v525, %v536
    %vm541 = vcmp.ge.s32.totalorder %v177, 3
    %vm542 = vcmp.ge.s32.totalorder %v178, 3
    %v543 = vsel %vm541, 1, 0
    %v544 = vsel %vm542, 1, 0
    %vm545 = vcmp.eq.s32.totalorder %v543, 1
    %vm546 = vcmp.eq.s32.totalorder %v544, 1
    %v547 = vsel %vm545, %v109, 0.0
    %v548 = vsel %vm546, %v147, 0.0
    %v549 = vsel %vm545, %v112, 0.0
    %v550 = vsel %vm546, %v150, 0.0
    %v553 = vrot.slane %v547, 4
    %v554 = vrot.slane %v548, 4
    %555 = vrot.lane.b32.xlu0 %v553, 45
    %v556 = vpop.permute.xlu0 %555
    %557 = vrot.lane.b32.xlu0 %v554, 45
    %v558 = vpop.permute.xlu0 %557
    %vm559 = vcmask 367616
    %v560 = vsel %vm559, %v556, %v558
    %v563 = vsel %vm559, 0.0, %v556
    %v564 = vadd.f32 %v539, %v563
    %v565 = vadd.f32 %v540, %v560
    %566 = vrot.lane.b32.xlu0 %v547, 125
    %v567 = vpop.permute.xlu0 %566
    %568 = vrot.lane.b32.xlu0 %v548, 125
    %v569 = vpop.permute.xlu0 %568
    %vm570 = vcmask 1022976
    %v571 = vsel %vm570, %v567, %v569
    %v573 = vsel %vm570, %v569, 0.0
    %v575 = vrot.slane %v571, 6
    %v576 = vrot.slane %v573, 6
    %v579 = vadd.f32 %v564, %v575
    %v580 = vadd.f32 %v565, %v576
    %583 = vrot.lane.b32.xlu0 %v549, 77
    %v584 = vpop.permute.xlu0 %583
    %585 = vrot.lane.b32.xlu0 %v550, 77
    %v586 = vpop.permute.xlu0 %585
    %vm587 = vcmask 629760
    %v588 = vsel %vm587, %v584, %v586
    %v591 = vsel %vm587, %v586, 0.0
    %v592 = vadd.f32 %v579, %v588
    %v593 = vadd.f32 %v580, %v591
    %v594 = vadd.f32 %v592, 1.0
    %v595 = vadd.f32 %v593, 1.0
    %v596 = vperm.slane %v594, 0
    %v597 = vperm.slane %v595, 0
    %v598 = vmul.f32 %v17, %v596
    %v599 = vmul.f32 %v18, %v597
    %600 = vst [vmem:[#allocation2] sm:$0xf] %v598
    %601 = vst [vmem:[#allocation2 + $0x8] sm:$0xf] %v599
    %v602 = vperm.slane %v594, 1
    %v603 = vperm.slane %v595, 1
    %v604 = vmul.f32 %v17, %v602
    %v605 = vmul.f32 %v18, %v603
    %606 = vst [vmem:[#allocation2] sm:$0xf0] %v604
    %607 = vst [vmem:[#allocation2 + $0x8] sm:$0xf0] %v605
    // Predicated region
    $region14: #{tpu_custom_call.1} parent=1 // pred_check
      _
    $region15: #{tpu_custom_call.1} parent=1 // pred_check_branch
      %609 = sbr.rel (0) target = $region17
    $region16: #{tpu_custom_call.1} parent=1 // pred_region
      %611 = vsyncadd [#allocation3], 0
      %s613 = sshll.u32 [#allocation2], 4
      %s614 = int_to_ptr.vmem [resolvable:$true] %s613
      %s615 = sshll.u32 %s3, 4
      %s616 = int_to_ptr.hbm [resolvable:$true] %s615
      %618 = dma.vmem_to_hbm [thread:$0]  %s614, 256, %s616, [#allocation3]
    $region17: #{tpu_custom_call.1} parent=1 // pred_fallthru
      _
    // Predicated region
    $region18: #{tpu_custom_call.1} parent=1 // pred_check
      _
    $region19: #{tpu_custom_call.1} parent=1 // pred_check_branch
      %620 = sbr.rel (0) target = $region21
    $region20: #{tpu_custom_call.1} parent=1 // pred_region
      %622 = dma.done [#allocation3], 256
    $region21: #{tpu_custom_call.1} parent=1 // pred_fallthru
      _
    %623 = vsyncpa [#allocation3], 1

</llo_original>
